<compile_context>
chip_gen: v7x
topology: tpu7x:2x2x1
jax: 0.10.0
libtpu: 0.0.40
codegen_flags: <defaults>
</compile_context>

<pallas_src>
import jax
import jax.numpy as jnp
from jax.experimental import pallas as pl
from jax.experimental.pallas import tpu as pltpu

SC_PRIMITIVES = ("none", "skip_connect")

_LANE = 128
_MAX_TILE_ROWS = 8192            # 8192 x 128 f32 = 4 MiB per tile
_UNALIGNED_LANE_BLOCK = 65536    # (1, 64Ki) blocks for the lane-unaligned path
_VMEM_LIMIT_BYTES = 32 * 1024 * 1024


def _sc_mixed_kernel(w_ref, x_ref, o_ref):
    """out = w[0] * Zero(x) + w[1] * Identity(x)  (exact, incl. NaN/Inf w[0])."""
    w_none = w_ref[0] * 0.0          # scalar; reproduces the 'none' branch exactly
    w_skip = w_ref[1]
    x = x_ref[...].astype(jnp.float32)   # f32 compute is safe on v5e (no bf16 VALU)
    o_ref[...] = (w_skip * x + w_none).astype(o_ref.dtype)


def _cost(n_elems, in_dtype, out_dtype):
    return pl.CostEstimate(
        flops=2 * n_elems,
        transcendentals=0,
        bytes_accessed=n_elems
        * (jnp.dtype(in_dtype).itemsize + jnp.dtype(out_dtype).itemsize),
    )


def _compiler_params():
    return pltpu.CompilerParams(
        dimension_semantics=("parallel",),      # TC sharding on multi-core parts
        vmem_limit_bytes=_VMEM_LIMIT_BYTES,
    )


def _run_rows(x2d, w_f32, out_dtype):
    """Lane-aligned path: x2d is (rows, 128); big row tiles, edge block masked."""
    rows = x2d.shape[0]
    tile_rows = rows if rows <= _MAX_TILE_ROWS else _MAX_TILE_ROWS
    grid = (pl.cdiv(rows, tile_rows),)
    return pl.pallas_call(
        _sc_mixed_kernel,
        out_shape=jax.ShapeDtypeStruct((rows, _LANE), out_dtype),
        grid=grid,
        in_specs=[
            pl.BlockSpec(memory_space=pltpu.MemorySpace.SMEM),   # arch weights
            pl.BlockSpec((tile_rows, _LANE), lambda i: (i, 0)),  # activations
        ],
        out_specs=pl.BlockSpec((tile_rows, _LANE), lambda i: (i, 0)),
        compiler_params=_compiler_params(),
        cost_estimate=_cost(rows * _LANE, x2d.dtype, out_dtype),
    )(w_f32, x2d)


def _run_flat(flat, w_f32, out_dtype):
    """Lane-unaligned fallback: (1, n) view tiled along lanes, no copies."""
    n = flat.shape[0]
    x1 = flat.reshape(1, n)                       # free bitcast reshape
    block_cols = n if n <= _UNALIGNED_LANE_BLOCK else _UNALIGNED_LANE_BLOCK
    grid = (pl.cdiv(n, block_cols),)
    out = pl.pallas_call(
        _sc_mixed_kernel,
        out_shape=jax.ShapeDtypeStruct((1, n), out_dtype),
        grid=grid,
        in_specs=[
            pl.BlockSpec(memory_space=pltpu.MemorySpace.SMEM),
            pl.BlockSpec((1, block_cols), lambda i: (0, i)),
        ],
        out_specs=pl.BlockSpec((1, block_cols), lambda i: (0, i)),
        compiler_params=_compiler_params(),
        cost_estimate=_cost(n, flat.dtype, out_dtype),
    )(w_f32, x1)
    return out.reshape(n)


def sc_mixed_op(x, weights):
    """x: any-shape float tensor, weights: (len(SC_PRIMITIVES),) mixing weights."""
    assert weights.shape == (len(SC_PRIMITIVES),)
    out_dtype = jnp.result_type(x.dtype, weights.dtype)   # match reference promotion
    w_f32 = weights.astype(jnp.float32)

    orig_shape = x.shape
    flat = x.reshape(-1)          # free: contiguous row-major reshape
    n = flat.shape[0]
    if n == 0:
        return jnp.zeros(orig_shape, out_dtype)

    if n % _LANE == 0:
        # Fully lane-dense 2-D view; reshape is a bitcast, no data movement.
        out_flat = _run_rows(flat.reshape(n // _LANE, _LANE), w_f32, out_dtype)
        out_flat = out_flat.reshape(-1)
    else:
        # Rare ragged-lane case: single (1, n) view, edge block masked in-kernel.
        out_flat = _run_flat(flat, w_f32, out_dtype)

    return out_flat.reshape(orig_shape)


def sc_mixed_op_ref(x, weights):
    """Pure-JAX reference mirroring the PyTorch forward loop."""
    mixed_res = []
    mixed_res.append(weights[0] * jnp.zeros_like(x))  # 'none'
    mixed_res.append(weights[1] * x)                  # 'skip_connect'
    return sum(mixed_res)


if __name__ == "__main__":
    key = jax.random.PRNGKey(0)
    kx, kw, kx2, kx3 = jax.random.split(key, 4)

    # Architecture weights (softmax over primitives, DARTS-style search).
    weights = jax.nn.softmax(
        jax.random.normal(kw, (len(SC_PRIMITIVES),), dtype=jnp.float32)
    )

    # 1) Lane-aligned NCHW input (2*4*16*16 = 2048 elems, % 128 == 0).
    x = jax.random.normal(kx, (2, 4, 16, 16), dtype=jnp.float32)
    out = jax.block_until_ready(sc_mixed_op(x, weights))
    ref = sc_mixed_op_ref(x, weights)
    assert out.shape == ref.shape and out.dtype == ref.dtype
    assert jnp.allclose(out, ref, atol=1e-6, rtol=1e-6)

    # 2) Lane-unaligned shape (2*4*17*17 = 2312 elems, % 128 != 0).
    x2 = jax.random.normal(kx2, (2, 4, 17, 17), dtype=jnp.float32)
    out2 = jax.block_until_ready(sc_mixed_op(x2, weights))
    ref2 = sc_mixed_op_ref(x2, weights)
    assert out2.shape == ref2.shape and out2.dtype == ref2.dtype
    assert jnp.allclose(out2, ref2, atol=1e-6, rtol=1e-6)

    # 3) bf16 activations: reference promotes to f32 output; kernel matches.
    x3 = jax.random.normal(kx3, (2, 4, 16, 16), dtype=jnp.bfloat16)
    out3 = jax.block_until_ready(sc_mixed_op(x3, weights))
    ref3 = sc_mixed_op_ref(x3, weights)
    assert out3.shape == ref3.shape and out3.dtype == ref3.dtype
    assert jnp.allclose(out3, ref3, atol=1e-5, rtol=1e-5)

    print("KERNEL_OK")
</pallas_src>

<mosaic_0001>
module attributes {stable_mosaic.version = 11 : i64} {
  func.func @_sc_mixed_kernel(%arg0: i32, %arg1: memref<2xf32, #tpu.memory_space<smem>>, %arg2: memref<16x128xf32, #tpu.memory_space<vmem>>, %arg3: memref<16x128xf32, #tpu.memory_space<vmem>>) attributes {dimension_semantics = [#tpu.dimension_semantics<parallel>], iteration_bounds = array<i64: 1>, scalar_prefetch = 0 : i64, scratch_operands = 0 : i64, tpu.core_type = #tpu.core_type<tc>, window_params = [{transform_indices = @transform_0, window_bounds = array<i64: 2>}, {transform_indices = @transform_1, window_bounds = array<i64: 16, 128>}, {transform_indices = @transform_2, window_bounds = array<i64: 16, 128>}]} {
    %c0 = arith.constant 0 : index
    %0 = memref.load %arg1[%c0] : memref<2xf32, #tpu.memory_space<smem>>
    %cst = arith.constant 0.000000e+00 : f32
    %1 = arith.mulf %0, %cst : f32
    %c1 = arith.constant 1 : index
    %2 = memref.load %arg1[%c1] : memref<2xf32, #tpu.memory_space<smem>>
    %c0_0 = arith.constant 0 : index
    %c0_1 = arith.constant 0 : index
    %3 = vector.load %arg2[%c0_0, %c0_1] : memref<16x128xf32, #tpu.memory_space<vmem>>, vector<16x128xf32>
    %4 = vector.broadcast %2 : f32 to vector<16x128xf32>
    %5 = arith.mulf %4, %3 : vector<16x128xf32>
    %6 = vector.broadcast %1 : f32 to vector<16x128xf32>
    %7 = arith.addf %5, %6 : vector<16x128xf32>
    %c0_2 = arith.constant 0 : index
    %c0_3 = arith.constant 0 : index
    %8 = vector.load %arg3[%c0_2, %c0_3] : memref<16x128xf32, #tpu.memory_space<vmem>>, vector<16x128xf32>
    tpu.vector_store %arg3[%c0_2, %c0_3], %7 {strides = array<i32>} : memref<16x128xf32, #tpu.memory_space<vmem>>, vector<16x128xf32>,
    return
  }
  func.func @transform_0(%arg0: i32) -> i32 {
    %c0_i32 = arith.constant 0 : i32
    %c0_i32_0 = arith.constant 0 : i32
    return %c0_i32 : i32
  }
  func.func @transform_1(%arg0: i32) -> (i32, i32) {
    %c0_i32 = arith.constant 0 : i32
    %c0_i32_0 = arith.constant 0 : i32
    return %arg0, %c0_i32 : i32, i32
  }
  func.func @transform_2(%arg0: i32) -> (i32, i32) {
    %c0_i32 = arith.constant 0 : i32
    %c0_i32_0 = arith.constant 0 : i32
    return %arg0, %c0_i32 : i32, i32
  }
}

</mosaic_0001>

<llo_original>
// kernel: tpu_custom_call.1
$region0: #{tpu_custom_call.1}
  #allocation0 [shape = 'u32[]', space=smem, size = 0x4, offset = 0x4, fixed_abs, tag = 'smem constant byte address 0x4 - core index']
  #allocation1 [shape = 'u32[144,128]{1,0:T(1,128)}', space=vmem, size = 0x12000, scoped, tag = 'internal scratch']
  %s0 = inlined_call_operand.hbm [shape: f32[2], index: 0, kind: input, shape index: {}]
  %s1 = inlined_call_operand.hbm [shape: f32[16,128], index: 1, kind: input, shape index: {}]
  %s2 = inlined_call_operand.hbm [shape: f32[16,128], index: 2, kind: output, shape index: {}]
  %s3 = sld [smem:[#allocation0]]
  $region26: #{tpu_custom_call.1} parent=0
    _
  %s5 = ssub.s32 1, %s3
  %s6 = scalar_select 0, %s5, %s3
  $region1: #{tpu_custom_call.1} parent=0
    #allocation2 [shape = 'u8[512]{0}', space=smem, size = 0x200, scoped, tag = 'input window, operand 0, single buffered']
    #allocation3 [shape = 's32[1]{0}', space=sflag, size = 0x4, scoped, tag = 'scoped memory for tpu_custom_call.1']
    #allocation4 [shape = 's32[1]{0}', space=sflag, size = 0x4, scoped, tag = 'scoped memory for tpu_custom_call.1']
    #allocation5 [shape = 's32[1]{0}', space=sflag, size = 0x4, scoped, tag = 'scoped memory for tpu_custom_call.1']
    #allocation6 [shape = 'u8[8192]{0}', space=vmem, size = 0x2000, scoped, tag = 'input window, operand 1, single buffered']
    #allocation7 [shape = 'u8[8192]{0}', space=vmem, size = 0x2000, scoped, tag = 'output window, operand 0, single buffered']
    %7 = vsyncpa [#allocation5], 0
    %8 = vsyncpa [#allocation3], 0
    %9 = vsyncpa [#allocation4], 0
    // Predicated region
    $region2: #{tpu_custom_call.1} parent=1 // pred_check
      _
    $region3: #{tpu_custom_call.1} parent=1 // pred_check_branch
      %11 = sbr.rel (0) target = $region5
    $region4: #{tpu_custom_call.1} parent=1 // pred_region
      %s13 = ssub.s32 16, 16
      %14 = vsyncadd [#allocation5], %s13
      %17 = dma.hbm_to_smem %s0, 16, [#allocation2], [#allocation5]
    $region5: #{tpu_custom_call.1} parent=1 // pred_fallthru
      _
    // Predicated region
    $region6: #{tpu_custom_call.1} parent=1 // pred_check
      _
    $region7: #{tpu_custom_call.1} parent=1 // pred_check_branch
      %19 = sbr.rel (0) target = $region9
    $region8: #{tpu_custom_call.1} parent=1 // pred_region
      %s21 = ssub.s32 256, 256
      %22 = vsyncadd [#allocation3], %s21
      %s23 = sshll.u32 [#allocation6], 4
      %s24 = int_to_ptr.vmem [resolvable:$true] %s23
      %29 = dma.hbm_to_vmem [thread:$0]  %s1, 256, %s24, [#allocation3], 128, 128, 8
    $region9: #{tpu_custom_call.1} parent=1 // pred_fallthru
      _
    // Predicated region
    $region10: #{tpu_custom_call.1} parent=1 // pred_check
      _
    $region11: #{tpu_custom_call.1} parent=1 // pred_check_branch
      %31 = sbr.rel (0) target = $region13
    $region12: #{tpu_custom_call.1} parent=1 // pred_region
      %32 = dma.done [#allocation5], 16
    $region13: #{tpu_custom_call.1} parent=1 // pred_fallthru
      _
    // Predicated region
    $region14: #{tpu_custom_call.1} parent=1 // pred_check
      _
    $region15: #{tpu_custom_call.1} parent=1 // pred_check_branch
      %34 = sbr.rel (0) target = $region17
    $region16: #{tpu_custom_call.1} parent=1 // pred_region
      %35 = dma.done [#allocation3], 256
    $region17: #{tpu_custom_call.1} parent=1 // pred_fallthru
      _
    %36 = sfence
    %s37 = sld [smem:[#allocation2]]
    %s38 = smul.f32 %s37, 0.0
    %s39 = sld [smem:[#allocation2 + $0x1]]
    %v40 = vld [vmem:[#allocation6] sm:$0xff]
    %v41 = vld [vmem:[#allocation6 + $0x8] sm:$0xff]
    %v42 = vstv %s39
    %v43 = vmul.f32 %v42, %v40
    %v44 = vmul.f32 %v42, %v41
    %v45 = vstv %s38
    %v46 = vadd.f32 %v43, %v45
    %v47 = vadd.f32 %v44, %v45
    %48 = vst [vmem:[#allocation7] sm:$0xff] %v46
    %49 = vst [vmem:[#allocation7 + $0x8] sm:$0xff] %v47
    // Predicated region
    $region18: #{tpu_custom_call.1} parent=1 // pred_check
      _
    $region19: #{tpu_custom_call.1} parent=1 // pred_check_branch
      %51 = sbr.rel (0) target = $region21
    $region20: #{tpu_custom_call.1} parent=1 // pred_region
      %s53 = ssub.s32 256, 256
      %54 = vsyncadd [#allocation4], %s53
      %s55 = sshll.u32 [#allocation7], 4
      %s56 = int_to_ptr.vmem [resolvable:$true] %s55
      %61 = dma.vmem_to_hbm [thread:$0]  %s56, 256, %s2, [#allocation4], 128, 128, 8
    $region21: #{tpu_custom_call.1} parent=1 // pred_fallthru
      _
    // Predicated region
    $region22: #{tpu_custom_call.1} parent=1 // pred_check
      _
    $region23: #{tpu_custom_call.1} parent=1 // pred_check_branch
      %63 = sbr.rel (0) target = $region25
    $region24: #{tpu_custom_call.1} parent=1 // pred_region
      %64 = dma.done [#allocation4], 256
    $region25: #{tpu_custom_call.1} parent=1 // pred_fallthru
      _
    %65 = vsyncpa [#allocation3], 1
    %66 = vsyncpa [#allocation4], 1
    %67 = vsyncpa [#allocation5], 1

</llo_original>
